<compile_context>
chip_gen: v6e
topology: v6e:2x2x1
jax: 0.10.0
libtpu: 0.0.40
codegen_flags: <defaults>
</compile_context>

<pallas_src>
import functools
import numpy as np

import jax
import jax.numpy as jnp
from jax.experimental import pallas as pl
from jax.experimental.pallas import tpu as pltpu


# ----------------------------------------------------------------------------
# Small helpers
# ----------------------------------------------------------------------------

def _round_up(x, m):
    return (x + m - 1) // m * m


def _cdiv(a, b):
    return (a + b - 1) // b


# ----------------------------------------------------------------------------
# Chip configuration (derived lazily, not at module import)
# ----------------------------------------------------------------------------

@functools.lru_cache(maxsize=None)
def _chip_config():
    vmem = None
    cores = 1
    kind = ""
    try:
        kind = jax.devices()[0].device_kind.lower()
    except Exception:
        kind = ""
    try:
        info = pltpu.get_tpu_info()
        for attr in ("vmem_capacity_bytes", "vmem_size_bytes", "vmem_bytes"):
            v = getattr(info, attr, None)
            if v:
                vmem = int(v)
                break
        c = getattr(info, "num_cores", None) or getattr(info, "core_count", None)
        if c:
            cores = int(c)
    except Exception:
        pass
    if vmem is None:
        # 128 MiB on v4/v5e/v6e, 64 MiB per TC on v7x; default conservative.
        if any(s in kind for s in ("v4", "v5", "v6")):
            vmem = 128 << 20
        else:
            vmem = 64 << 20
    if cores < 2 and "v7" in kind:
        cores = 2
    # MXU width: 128 on v2-v5e, 256 on v6e/v7x.
    mxu = 128 if any(s in kind for s in ("v2", "v3", "v4", "v5")) else 256
    return {"vmem": int(vmem), "cores": int(cores), "mxu": int(mxu)}


# ----------------------------------------------------------------------------
# Tile selection (even divisors of the padded dims; generation aware)
# ----------------------------------------------------------------------------

def _div_tile(dim, pref_align, cap):
    """Largest 128-multiple divisor of `dim` that is <= cap, preferring
    multiples of pref_align.  `dim` is always a multiple of 128."""
    q = dim // 128
    cap = max(cap, 128)
    cands = [128 * f for f in range(1, q + 1) if q % f == 0 and 128 * f <= cap]
    pref = [c for c in cands if c % pref_align == 0]
    return max(pref) if pref else max(cands)


def _m_tile(M, cap):
    """Even split of round_up(M,16) into 16-aligned tiles <= cap."""
    M16 = _round_up(M, 16)
    nt = _cdiv(M16, cap)
    tm = _round_up(_cdiv(M16, nt), 16)
    return tm, nt * tm


def _choose_tiles(M, Kp, Np, out_bytes, cfg):
    vmem = cfg["vmem"]
    big_vmem = vmem >= (100 << 20)            # v5e / v6e (128 MiB)
    align = 256 if cfg["mxu"] >= 256 else 128
    tm_cap = 1024 if big_vmem else 512        # v7x keeps tm <= 512
    budget = max(16 << 20, vmem // 2)

    tk = _div_tile(Kp, align, 2048)
    tn = _div_tile(Np, align, 2048)
    tm, Mp = _m_tile(M, tm_cap)

    def usage(tm_, tk_, tn_):
        a = 2 * tm_ * tk_ * 2          # bf16 A tile, double-buffered
        b = 2 * tk_ * tn_ * 2          # bf16 B tile, double-buffered
        s = 2 * tn_ * 4                # shift row
        o = 2 * tm_ * tn_ * out_bytes  # output tile, double-buffered
        acc = tm_ * tn_ * 4            # f32 accumulator scratch
        return a + b + s + o + acc

    shrink_tn_first = not big_vmem     # v7x: shrink tn before tk
    while usage(tm, tk, tn) > budget:
        if shrink_tn_first and tn > 128:
            tn = _div_tile(Np, align, tn - 128)
        elif tk > 128:
            tk = _div_tile(Kp, align, tk - 128)
        elif tn > 128:
            tn = _div_tile(Np, align, tn - 128)
        elif tm > 16:
            tm, Mp = _m_tile(M, max(16, tm // 2))
        else:
            break
    return tm, tk, tn, Mp


# ----------------------------------------------------------------------------
# Fused matmul + (BN-folded) shift + activation Pallas kernel
# ----------------------------------------------------------------------------

def _mm_kernel(a_ref, b_ref, sh_ref, o_ref, acc_ref, *, act):
    k = pl.program_id(2)
    prod = jnp.dot(a_ref[...], b_ref[...], preferred_element_type=jnp.float32)

    @pl.when(k == 0)
    def _first():                 # write first partial directly (no zero init)
        acc_ref[...] = prod

    @pl.when(k > 0)
    def _rest():
        acc_ref[...] += prod

    @pl.when(k == pl.num_programs(2) - 1)
    def _fin():
        y = acc_ref[...] + sh_ref[...]
        if act == "relu":
            y = jnp.maximum(y, 0.0)
        o_ref[...] = y.astype(o_ref.dtype)


# Below this MAC count a pallas_call launch costs more than the GEMM itself.
_PALLAS_MIN_MACS = 1 << 21


def matmul_bias_act(a, b, shift_row, n_out, act="relu", out_dtype=jnp.float32):
    """act((a @ b) + shift)[:, :n_out].

    a: (M, K) activations (any float dtype, cast to bf16 here if needed)
    b: (Kp, Np) PRE-padded, PRE-folded bf16 weights (Kp,Np multiples of 128)
    shift_row: (1, Np) f32 pre-padded per-channel shift
    """
    M, K = a.shape
    Kp, Np = b.shape
    assert K <= Kp and n_out <= Np

    a = a.astype(jnp.bfloat16)
    if K < Kp:
        a = jnp.pad(a, ((0, 0), (0, Kp - K)))

    # Tiny GEMM: let XLA fuse it with the surrounding glue instead of a
    # padded pallas_call launch.
    if M * Kp * Np < _PALLAS_MIN_MACS:
        y = jnp.dot(a, b, preferred_element_type=jnp.float32) + shift_row
        if act == "relu":
            y = jnp.maximum(y, 0.0)
        return y[:, :n_out].astype(out_dtype)

    cfg = _chip_config()
    out_bytes = jnp.dtype(out_dtype).itemsize
    tm, tk, tn, Mp = _choose_tiles(M, Kp, Np, out_bytes, cfg)

    # Single-(M,N)-tile grids only benefit from an N split when there are 2
    # TensorCores (v7x) to shard the 'parallel' axis across.
    if (cfg["cores"] >= 2 and Mp // tm == 1 and Np // tn == 1
            and tn >= 256 and tn % 256 == 0):
        tn //= 2

    if Mp != M:
        a = jnp.pad(a, ((0, Mp - M), (0, 0)))

    budget = max(16 << 20, cfg["vmem"] // 2)
    vmem_limit = int(min(0.85 * cfg["vmem"], budget + (16 << 20)))

    grid = (Mp // tm, Np // tn, Kp // tk)
    out = pl.pallas_call(
        functools.partial(_mm_kernel, act=act),
        out_shape=jax.ShapeDtypeStruct((Mp, Np), out_dtype),
        grid_spec=pltpu.PrefetchScalarGridSpec(
            num_scalar_prefetch=0,
            grid=grid,
            in_specs=[
                pl.BlockSpec((tm, tk), lambda i, j, k: (i, k)),
                pl.BlockSpec((tk, tn), lambda i, j, k: (k, j)),
                pl.BlockSpec((1, tn), lambda i, j, k: (0, j)),
            ],
            out_specs=pl.BlockSpec((tm, tn), lambda i, j, k: (i, j)),
            scratch_shapes=[pltpu.VMEM((tm, tn), jnp.float32)],
        ),
        compiler_params=pltpu.CompilerParams(
            dimension_semantics=("parallel", "parallel", "arbitrary"),
            vmem_limit_bytes=vmem_limit),
    )(a, b, shift_row)
    return out[:M, :n_out]


# ----------------------------------------------------------------------------
# Static JAX glue: pooling matrix, bilinear (align_corners=True) upsample
# ----------------------------------------------------------------------------

@functools.lru_cache(maxsize=None)
def _pooling_matrix(H, W, pool_sizes):
    """Constant (sum(p*p), H*W) matrix implementing AdaptiveAvgPool2d for all
    pool sizes at once (PyTorch bin semantics)."""
    rows = []
    for p in pool_sizes:
        for i in range(p):
            hs, he = (i * H) // p, -((-(i + 1) * H) // p)
            for j in range(p):
                ws, we = (j * W) // p, -((-(j + 1) * W) // p)
                m = np.zeros((H, W), np.float32)
                m[hs:he, ws:we] = 1.0 / ((he - hs) * (we - ws))
                rows.append(m.reshape(-1))
    return np.stack(rows, axis=0)


@functools.lru_cache(maxsize=None)
def _bilinear_matrix_np(out_size, in_size):
    """align_corners=True interpolation matrix (out_size, in_size)."""
    M = np.zeros((out_size, in_size), np.float32)
    if in_size == 1:
        M[:, 0] = 1.0
    else:
        for o in range(out_size):
            src = 0.0 if out_size == 1 else o * (in_size - 1) / (out_size - 1)
            i0 = min(int(np.floor(src)), in_size - 2)
            frac = src - i0
            M[o, i0] += 1.0 - frac
            M[o, i0 + 1] += frac
    return M


def upsample_bilinear(x, p, H, W):
    """x: (B, p*p, C) -> (B, H*W, C), bilinear align_corners=True (in x.dtype)."""
    B, _, C = x.shape
    xi = x.reshape(B, p, p, C)
    Mh = jnp.asarray(_bilinear_matrix_np(H, p), dtype=x.dtype)
    Mw = jnp.asarray(_bilinear_matrix_np(W, p), dtype=x.dtype)
    y = jnp.einsum('oh,bhwc->bowc', Mh, xi)
    y = jnp.einsum('pw,bowc->bopc', Mw, y)
    return y.reshape(B, H * W, C)


# ----------------------------------------------------------------------------
# Parameters (deterministic, PyTorch-default-like), inference-mode BN folding
# ----------------------------------------------------------------------------

def _uniform(key, shape, bound):
    return jax.random.uniform(key, shape, jnp.float32, -bound, bound)


def init_bn(key, c):
    k1, k2, k3, k4 = jax.random.split(key, 4)
    return dict(gamma=jax.random.uniform(k1, (c,), jnp.float32, 0.8, 1.2),
                beta=0.05 * jax.random.normal(k2, (c,), jnp.float32),
                mean=0.05 * jax.random.normal(k3, (c,), jnp.float32),
                var=jax.random.uniform(k4, (c,), jnp.float32, 0.8, 1.2))


def init_ppm(key, in_c, out_c, pool_sizes=(1, 2, 3, 6)):
    n = len(pool_sizes)
    ks = jax.random.split(key, 2 * n + 3)
    stages = []
    for i in range(n):
        w = _uniform(ks[2 * i], (in_c, out_c), 1.0 / np.sqrt(in_c))  # 1x1, bias=False
        stages.append(dict(w=w, bn=init_bn(ks[2 * i + 1], out_c)))
    cin_b = in_c + n * out_c
    bound = 1.0 / np.sqrt(cin_b)
    bw = _uniform(ks[-3], (cin_b, in_c), bound)      # bottleneck 1x1 conv (with bias)
    bb = _uniform(ks[-2], (in_c,), bound)
    return dict(stages=stages, bottleneck_w=bw, bottleneck_b=bb, bn=init_bn(ks[-1], in_c))


def prepare_inference(params, eps=1e-5):
    """Fold BN scale into weights, cast to bf16 and pad K/N to 128-multiples
    ONCE; shifts stay f32 and are pre-padded/reshaped for the epilogue."""
    ws, shs = [], []
    for st in params['stages']:
        bn = st['bn']
        inv = bn['gamma'] / jnp.sqrt(bn['var'] + eps)
        ws.append(st['w'] * inv[None, :])
        shs.append(bn['beta'] - bn['mean'] * inv)
    w_stage = jnp.concatenate(ws, axis=1)             # (C, n*out_c)
    shift_stage = jnp.concatenate(shs, axis=0)

    bn = params['bn']
    inv = bn['gamma'] / jnp.sqrt(bn['var'] + eps)
    bw = params['bottleneck_w'] * inv[None, :]        # (C + n*out_c, C)
    bsh = bn['beta'] + (params['bottleneck_b'] - bn['mean']) * inv

    def pack(w, sh):
        K, N = w.shape
        Kp, Np = _round_up(K, 128), _round_up(N, 128)
        w = jnp.pad(w, ((0, Kp - K), (0, Np - N))).astype(jnp.bfloat16)
        sh = jnp.pad(sh.astype(jnp.float32), (0, Np - N)).reshape(1, Np)
        return w, sh

    w_stage, shift_stage = pack(w_stage, shift_stage)
    bw, bsh = pack(bw, bsh)
    return dict(w_stage=w_stage, shift_stage=shift_stage,
                bottleneck_w=bw, bottleneck_shift=bsh)


# ----------------------------------------------------------------------------
# PPM forward
# ----------------------------------------------------------------------------

@functools.partial(jax.jit, static_argnames=("pool_sizes", "out_channels"))
def ppm_forward(prep, x_nchw, *, pool_sizes, out_channels):
    B, C, H, W = x_nchw.shape
    n = len(pool_sizes)
    x_bhwc = jnp.transpose(x_nchw, (0, 2, 3, 1))
    x_flat = x_bhwc.reshape(B, H * W, C)

    # --- all adaptive average pools as ONE constant-matrix contraction ---
    P = jnp.asarray(_pooling_matrix(H, W, pool_sizes))          # (S, HW) f32
    S = P.shape[0]
    pooled = jnp.einsum('ps,bsc->bpc', P, x_flat)               # (B, S, C) f32

    # --- all pyramid-stage 1x1 conv + BN + ReLU in ONE fused GEMM (bf16 out) ---
    a_stage = pooled.astype(jnp.bfloat16).reshape(B * S, C)
    stage_out = matmul_bias_act(a_stage, prep['w_stage'], prep['shift_stage'],
                                n_out=n * out_channels, act="relu",
                                out_dtype=jnp.bfloat16)
    stage_out = stage_out.reshape(B, S, n * out_channels)

    pyramids = [x_flat.astype(jnp.bfloat16)]
    off = 0
    for i, p in enumerate(pool_sizes):
        blk = stage_out[:, off:off + p * p,
                        i * out_channels:(i + 1) * out_channels]
        off += p * p
        pyramids.append(upsample_bilinear(blk, p, H, W))        # bf16 (B, HW, out_c)

    # --- bottleneck 1x1 conv + bias + BN + ReLU (fused Pallas GEMM, f32 out) ---
    cat = jnp.concatenate(pyramids, axis=-1).reshape(
        B * H * W, C + n * out_channels)                        # bf16
    y = matmul_bias_act(cat, prep['bottleneck_w'], prep['bottleneck_shift'],
                        n_out=C, act="relu", out_dtype=jnp.float32)
    return jnp.transpose(y.reshape(B, H, W, C), (0, 3, 1, 2))


# ----------------------------------------------------------------------------
# Pure-JAX f32 reference (PyTorch semantics) for correctness checking
# ----------------------------------------------------------------------------

def _adaptive_avg_pool_ref(x_bhwc, p):
    B, H, W, C = x_bhwc.shape
    rows = []
    for i in range(p):
        hs, he = (i * H) // p, -((-(i + 1) * H) // p)
        cols = []
        for j in range(p):
            ws, we = (j * W) // p, -((-(j + 1) * W) // p)
            cols.append(jnp.mean(x_bhwc[:, hs:he, ws:we, :], axis=(1, 2)))
        rows.append(jnp.stack(cols, axis=1))
    return jnp.stack(rows, axis=1)          # (B, p, p, C)


def ppm_reference(params, x_nchw, pool_sizes, out_channels, eps=1e-5):
    B, C, H, W = x_nchw.shape
    x = jnp.transpose(x_nchw, (0, 2, 3, 1))

    def bn_apply(y, bn):
        inv = bn['gamma'] / jnp.sqrt(bn['var'] + eps)
        return (y - bn['mean']) * inv + bn['beta']

    pyramids = [x]
    for st, p in zip(params['stages'], pool_sizes):
        pooled = _adaptive_avg_pool_ref(x, p)
        y = pooled @ st['w']
        y = jnp.maximum(bn_apply(y, st['bn']), 0.0)
        Mh = jnp.asarray(_bilinear_matrix_np(H, p))
        Mw = jnp.asarray(_bilinear_matrix_np(W, p))
        y = jnp.einsum('oh,bhwc->bowc', Mh, y)
        y = jnp.einsum('pw,bowc->bopc', Mw, y)
        pyramids.append(y)
    cat = jnp.concatenate(pyramids, axis=-1)
    y = cat @ params['bottleneck_w'] + params['bottleneck_b']
    y = jnp.maximum(bn_apply(y, params['bn']), 0.0)
    return jnp.transpose(y, (0, 3, 1, 2))


# ----------------------------------------------------------------------------
# Demo
# ----------------------------------------------------------------------------

if __name__ == "__main__":
    B, C, H, W = 2, 64, 16, 16
    out_c = C // 4
    pool_sizes = (1, 2, 3, 6)

    key = jax.random.PRNGKey(0)
    kp, kx = jax.random.split(key)
    params = init_ppm(kp, C, out_c, pool_sizes)
    prep = prepare_inference(params)
    x = jax.random.normal(kx, (B, C, H, W), jnp.float32)

    y = ppm_forward(prep, x, pool_sizes=pool_sizes, out_channels=out_c)
    y = jax.block_until_ready(y)

    assert y.shape == (B, C, H, W), y.shape
    assert bool(jnp.all(jnp.isfinite(y))), "non-finite output"
    assert bool(jnp.all(y >= 0.0)), "ReLU output must be non-negative"

    # Tolerance check against an f32 PyTorch-semantics reference (bf16 path).
    y_ref = np.asarray(ppm_reference(params, x, pool_sizes, out_c))
    y_np = np.asarray(y)
    rel_err = np.linalg.norm(y_np - y_ref) / (np.linalg.norm(y_ref) + 1e-12)
    assert rel_err < 3e-2, f"relative error too large: {rel_err:.4f}"

    print("KERNEL_OK")
</pallas_src>

<mosaic_0001>
module attributes {stable_mosaic.version = 11 : i64} {
  func.func @_mm_kernel(%arg0: i32, %arg1: i32, %arg2: i32, %arg3: memref<512x128xbf16, #tpu.memory_space<vmem>>, %arg4: memref<128x128xbf16, #tpu.memory_space<vmem>>, %arg5: memref<1x128xf32, #tpu.memory_space<vmem>>, %arg6: memref<512x128xf32, #tpu.memory_space<vmem>>, %arg7: memref<512x128xf32, #tpu.memory_space<vmem>>) attributes {dimension_semantics = [#tpu.dimension_semantics<parallel>, #tpu.dimension_semantics<parallel>, #tpu.dimension_semantics<arbitrary>], iteration_bounds = array<i64: 1, 1, 1>, scalar_prefetch = 0 : i64, scratch_operands = 1 : i64, tpu.core_type = #tpu.core_type<tc>, window_params = [{transform_indices = @transform_0, window_bounds = array<i64: 512, 128>}, {transform_indices = @transform_1, window_bounds = array<i64: 128, 128>}, {transform_indices = @transform_2, window_bounds = array<i64: 1, 128>}, {transform_indices = @transform_3, window_bounds = array<i64: 512, 128>}]} {
    %c0 = arith.constant 0 : index
    %c0_0 = arith.constant 0 : index
    %0 = vector.load %arg3[%c0, %c0_0] : memref<512x128xbf16, #tpu.memory_space<vmem>>, vector<512x128xbf16>
    %c0_1 = arith.constant 0 : index
    %c0_2 = arith.constant 0 : index
    %1 = vector.load %arg4[%c0_1, %c0_2] : memref<128x128xbf16, #tpu.memory_space<vmem>>, vector<128x128xbf16>
    %cst = arith.constant dense<0.000000e+00> : vector<512x128xf32>
    %2 = tpu.matmul %0, %1, %cst {dimension_numbers = #tpu.dot_dimension_numbers<[1], [0], [0], [1], [0, 0, 1, 1], [], []>} : vector<512x128xbf16>, vector<128x128xbf16>, vector<512x128xf32> -> vector<512x128xf32>
    %c0_i32 = arith.constant 0 : i32
    %3 = arith.cmpi eq, %arg2, %c0_i32 : i32
    %4 = arith.extui %3 : i1 to i32
    %c0_i32_3 = arith.constant 0 : i32
    %5 = arith.cmpi ne, %4, %c0_i32_3 : i32
    scf.if %5 {
      %c0_8 = arith.constant 0 : index
      %c0_9 = arith.constant 0 : index
      %12 = vector.load %arg7[%c0_8, %c0_9] : memref<512x128xf32, #tpu.memory_space<vmem>>, vector<512x128xf32>
      tpu.vector_store %arg7[%c0_8, %c0_9], %2 {strides = array<i32>} : memref<512x128xf32, #tpu.memory_space<vmem>>, vector<512x128xf32>,
    } else {
    }
    %c0_i32_4 = arith.constant 0 : i32
    %6 = arith.cmpi sgt, %arg2, %c0_i32_4 : i32
    %7 = arith.extui %6 : i1 to i32
    %c0_i32_5 = arith.constant 0 : i32
    %8 = arith.cmpi ne, %7, %c0_i32_5 : i32
    scf.if %8 {
      %c0_8 = arith.constant 0 : index
      %c0_9 = arith.constant 0 : index
      %12 = vector.load %arg7[%c0_8, %c0_9] : memref<512x128xf32, #tpu.memory_space<vmem>>, vector<512x128xf32>
      %13 = arith.addf %12, %2 : vector<512x128xf32>
      %c0_10 = arith.constant 0 : index
      %c0_11 = arith.constant 0 : index
      %14 = vector.load %arg7[%c0_10, %c0_11] : memref<512x128xf32, #tpu.memory_space<vmem>>, vector<512x128xf32>
      tpu.vector_store %arg7[%c0_10, %c0_11], %13 {strides = array<i32>} : memref<512x128xf32, #tpu.memory_space<vmem>>, vector<512x128xf32>,
    } else {
    }
    %c0_i32_6 = arith.constant 0 : i32
    %9 = arith.cmpi eq, %arg2, %c0_i32_6 : i32
    %10 = arith.extui %9 : i1 to i32
    %c0_i32_7 = arith.constant 0 : i32
    %11 = arith.cmpi ne, %10, %c0_i32_7 : i32
    scf.if %11 {
      %c0_8 = arith.constant 0 : index
      %c0_9 = arith.constant 0 : index
      %12 = vector.load %arg7[%c0_8, %c0_9] : memref<512x128xf32, #tpu.memory_space<vmem>>, vector<512x128xf32>
      %c0_10 = arith.constant 0 : index
      %c0_11 = arith.constant 0 : index
      %13 = vector.load %arg5[%c0_10, %c0_11] : memref<1x128xf32, #tpu.memory_space<vmem>>, vector<1x128xf32>
      %14 = vector.broadcast %13 : vector<1x128xf32> to vector<512x128xf32>
      %15 = arith.addf %12, %14 : vector<512x128xf32>
      %cst_12 = arith.constant 0.000000e+00 : f32
      %16 = vector.broadcast %cst_12 : f32 to vector<512x128xf32>
      %17 = arith.maximumf %15, %16 : vector<512x128xf32>
      %c0_13 = arith.constant 0 : index
      %c0_14 = arith.constant 0 : index
      %18 = vector.load %arg6[%c0_13, %c0_14] : memref<512x128xf32, #tpu.memory_space<vmem>>, vector<512x128xf32>
      tpu.vector_store %arg6[%c0_13, %c0_14], %17 {strides = array<i32>} : memref<512x128xf32, #tpu.memory_space<vmem>>, vector<512x128xf32>,
    } else {
    }
    return
  }
  func.func @transform_0(%arg0: i32, %arg1: i32, %arg2: i32) -> (i32, i32) {
    %c0_i32 = arith.constant 0 : i32
    return %arg0, %arg2 : i32, i32
  }
  func.func @transform_1(%arg0: i32, %arg1: i32, %arg2: i32) -> (i32, i32) {
    %c0_i32 = arith.constant 0 : i32
    return %arg2, %arg1 : i32, i32
  }
  func.func @transform_2(%arg0: i32, %arg1: i32, %arg2: i32) -> (i32, i32) {
    %c0_i32 = arith.constant 0 : i32
    %c0_i32_0 = arith.constant 0 : i32
    return %c0_i32, %arg1 : i32, i32
  }
  func.func @transform_3(%arg0: i32, %arg1: i32, %arg2: i32) -> (i32, i32) {
    %c0_i32 = arith.constant 0 : i32
    return %arg0, %arg1 : i32, i32
  }
}

</mosaic_0001>

<llo_original>
// kernel: ppm_forward.1
$region0: #{ppm_forward.1}
  #allocation0 [shape = 'u32[]', space=smem, size = 0x4, offset = 0x4, fixed_abs, tag = 'smem constant byte address 0x4 - core index']
  #allocation1 [shape = 'u32[144,128]{1,0:T(1,128)}', space=vmem, size = 0x12000, scoped, tag = 'internal scratch']
  #allocation2 [shape = 'f32[512,128]{1,0:T(8,128)}', space=vmem, size = 0x40000, scoped, tag = 'scratch operand']
  %s0 = inlined_call_operand.vmem [shape: bf16[512,128], index: 0, kind: input, shape index: {}]
  %s1 = inlined_call_operand.vmem [shape: bf16[128,128], index: 1, kind: input, shape index: {}]
  %s2 = inlined_call_operand.vmem [shape: f32[1,128], index: 2, kind: input, shape index: {}]
  %s3 = inlined_call_operand.hbm [shape: f32[512,128], index: 3, kind: output, shape index: {}]
  %s4 = sld [smem:[#allocation0]]
  $region34: #{ppm_forward.1} parent=0
    _
  %s6 = ssub.s32 1, %s4
  %s7 = scalar_select 0, %s6, %s4
  $region1: #{ppm_forward.1} parent=0
    #allocation3 [shape = 'u8[262144]{0}', space=vmem, size = 0x40000, scoped, tag = 'output window, operand 0, single buffered']
    #allocation4 [shape = 's32[1]{0}', space=sflag, size = 0x4, scoped, tag = 'scoped memory for ppm_forward.1']
    %8 = vsyncpa [#allocation4], 0
    // Predicated region
    $region2: #{ppm_forward.1} parent=1 // pred_check
      _
    $region3: #{ppm_forward.1} parent=1 // pred_check_branch
      %10 = sbr.rel (0) target = $region5
    $region4: #{ppm_forward.1} parent=1 // pred_region
      _
    $region5: #{ppm_forward.1} parent=1 // pred_fallthru
      _
    // Predicated region
    $region6: #{ppm_forward.1} parent=1 // pred_check
      _
    $region7: #{ppm_forward.1} parent=1 // pred_check_branch
      %12 = sbr.rel (0) target = $region9
    $region8: #{ppm_forward.1} parent=1 // pred_region
      _
    $region9: #{ppm_forward.1} parent=1 // pred_fallthru
      _
    // Predicated region
    $region10: #{ppm_forward.1} parent=1 // pred_check
      _
    $region11: #{ppm_forward.1} parent=1 // pred_check_branch
      %14 = sbr.rel (0) target = $region13
    $region12: #{ppm_forward.1} parent=1 // pred_region
      _
    $region13: #{ppm_forward.1} parent=1 // pred_fallthru
      _
    %v16 = vld [vmem:[%s0] sm:$0xf]
    %v17 = vld [vmem:[%s0 + $0x4] sm:$0xf]
    %v18 = vld [vmem:[%s0 + $0x8] sm:$0xf]
    %v19 = vld [vmem:[%s0 + $0xc] sm:$0xf]
    %v20 = vld [vmem:[%s0 + $0x10] sm:$0xf]
    %v21 = vld [vmem:[%s0 + $0x14] sm:$0xf]
    %v22 = vld [vmem:[%s0 + $0x18] sm:$0xf]
    %v23 = vld [vmem:[%s0 + $0x1c] sm:$0xf]
    %v24 = vld [vmem:[%s0 + $0x20] sm:$0xf]
    %v25 = vld [vmem:[%s0 + $0x24] sm:$0xf]
    %v26 = vld [vmem:[%s0 + $0x28] sm:$0xf]
    %v27 = vld [vmem:[%s0 + $0x2c] sm:$0xf]
    %v28 = vld [vmem:[%s0 + $0x30] sm:$0xf]
    %v29 = vld [vmem:[%s0 + $0x34] sm:$0xf]
    %v30 = vld [vmem:[%s0 + $0x38] sm:$0xf]
    %v31 = vld [vmem:[%s0 + $0x3c] sm:$0xf]
    %v32 = vld [vmem:[%s0 + $0x40] sm:$0xf]
    %v33 = vld [vmem:[%s0 + $0x44] sm:$0xf]
    %v34 = vld [vmem:[%s0 + $0x48] sm:$0xf]
    %v35 = vld [vmem:[%s0 + $0x4c] sm:$0xf]
    %v36 = vld [vmem:[%s0 + $0x50] sm:$0xf]
    %v37 = vld [vmem:[%s0 + $0x54] sm:$0xf]
    %v38 = vld [vmem:[%s0 + $0x58] sm:$0xf]
    %v39 = vld [vmem:[%s0 + $0x5c] sm:$0xf]
    %v40 = vld [vmem:[%s0 + $0x60] sm:$0xf]
    %v41 = vld [vmem:[%s0 + $0x64] sm:$0xf]
    %v42 = vld [vmem:[%s0 + $0x68] sm:$0xf]
    %v43 = vld [vmem:[%s0 + $0x6c] sm:$0xf]
    %v44 = vld [vmem:[%s0 + $0x70] sm:$0xf]
    %v45 = vld [vmem:[%s0 + $0x74] sm:$0xf]
    %v46 = vld [vmem:[%s0 + $0x78] sm:$0xf]
    %v47 = vld [vmem:[%s0 + $0x7c] sm:$0xf]
    %v48 = vld [vmem:[%s0 + $0x80] sm:$0xf]
    %v49 = vld [vmem:[%s0 + $0x84] sm:$0xf]
    %v50 = vld [vmem:[%s0 + $0x88] sm:$0xf]
    %v51 = vld [vmem:[%s0 + $0x8c] sm:$0xf]
    %v52 = vld [vmem:[%s0 + $0x90] sm:$0xf]
    %v53 = vld [vmem:[%s0 + $0x94] sm:$0xf]
    %v54 = vld [vmem:[%s0 + $0x98] sm:$0xf]
    %v55 = vld [vmem:[%s0 + $0x9c] sm:$0xf]
    %v56 = vld [vmem:[%s0 + $0xa0] sm:$0xf]
    %v57 = vld [vmem:[%s0 + $0xa4] sm:$0xf]
    %v58 = vld [vmem:[%s0 + $0xa8] sm:$0xf]
    %v59 = vld [vmem:[%s0 + $0xac] sm:$0xf]
    %v60 = vld [vmem:[%s0 + $0xb0] sm:$0xf]
    %v61 = vld [vmem:[%s0 + $0xb4] sm:$0xf]
    %v62 = vld [vmem:[%s0 + $0xb8] sm:$0xf]
    %v63 = vld [vmem:[%s0 + $0xbc] sm:$0xf]
    %v64 = vld [vmem:[%s0 + $0xc0] sm:$0xf]
    %v65 = vld [vmem:[%s0 + $0xc4] sm:$0xf]
    %v66 = vld [vmem:[%s0 + $0xc8] sm:$0xf]
    %v67 = vld [vmem:[%s0 + $0xcc] sm:$0xf]
    %v68 = vld [vmem:[%s0 + $0xd0] sm:$0xf]
    %v69 = vld [vmem:[%s0 + $0xd4] sm:$0xf]
    %v70 = vld [vmem:[%s0 + $0xd8] sm:$0xf]
    %v71 = vld [vmem:[%s0 + $0xdc] sm:$0xf]
    %v72 = vld [vmem:[%s0 + $0xe0] sm:$0xf]
    %v73 = vld [vmem:[%s0 + $0xe4] sm:$0xf]
    %v74 = vld [vmem:[%s0 + $0xe8] sm:$0xf]
    %v75 = vld [vmem:[%s0 + $0xec] sm:$0xf]
    %v76 = vld [vmem:[%s0 + $0xf0] sm:$0xf]
    %v77 = vld [vmem:[%s0 + $0xf4] sm:$0xf]
    %v78 = vld [vmem:[%s0 + $0xf8] sm:$0xf]
    %v79 = vld [vmem:[%s0 + $0xfc] sm:$0xf]
    %v80 = vld [vmem:[%s1] sm:$0xf]
    %v81 = vld [vmem:[%s1 + $0x4] sm:$0xf]
    %v82 = vld [vmem:[%s1 + $0x8] sm:$0xf]
    %v83 = vld [vmem:[%s1 + $0xc] sm:$0xf]
    %v84 = vld [vmem:[%s1 + $0x10] sm:$0xf]
    %v85 = vld [vmem:[%s1 + $0x14] sm:$0xf]
    %v86 = vld [vmem:[%s1 + $0x18] sm:$0xf]
    %v87 = vld [vmem:[%s1 + $0x1c] sm:$0xf]
    %v88 = vld [vmem:[%s1 + $0x20] sm:$0xf]
    %v89 = vld [vmem:[%s1 + $0x24] sm:$0xf]
    %v90 = vld [vmem:[%s1 + $0x28] sm:$0xf]
    %v91 = vld [vmem:[%s1 + $0x2c] sm:$0xf]
    %v92 = vld [vmem:[%s1 + $0x30] sm:$0xf]
    %v93 = vld [vmem:[%s1 + $0x34] sm:$0xf]
    %v94 = vld [vmem:[%s1 + $0x38] sm:$0xf]
    %v95 = vld [vmem:[%s1 + $0x3c] sm:$0xf]
    %v160 = vunpack.c.l.b16 %v16
    %v161 = vunpack.c.l.b16 %v17
    %v162 = vunpack.c.l.b16 %v18
    %v163 = vunpack.c.l.b16 %v19
    %v164 = vunpack.c.l.b16 %v20
    %v165 = vunpack.c.l.b16 %v21
    %v166 = vunpack.c.l.b16 %v22
    %v167 = vunpack.c.l.b16 %v23
    %v168 = vunpack.c.l.b16 %v24
    %v169 = vunpack.c.l.b16 %v25
    %v170 = vunpack.c.l.b16 %v26
    %v171 = vunpack.c.l.b16 %v27
    %v172 = vunpack.c.l.b16 %v28
    %v173 = vunpack.c.l.b16 %v29
    %v174 = vunpack.c.l.b16 %v30
    %v175 = vunpack.c.l.b16 %v31
    %v176 = vunpack.c.l.b16 %v32
    %v177 = vunpack.c.l.b16 %v33
    %v178 = vunpack.c.l.b16 %v34
    %v179 = vunpack.c.l.b16 %v35
    %v180 = vunpack.c.l.b16 %v36
    %v181 = vunpack.c.l.b16 %v37
    %v182 = vunpack.c.l.b16 %v38
    %v183 = vunpack.c.l.b16 %v39
    %v184 = vunpack.c.l.b16 %v40
    %v185 = vunpack.c.l.b16 %v41
    %v186 = vunpack.c.l.b16 %v42
    %v187 = vunpack.c.l.b16 %v43
    %v188 = vunpack.c.l.b16 %v44
    %v189 = vunpack.c.l.b16 %v45
    %v190 = vunpack.c.l.b16 %v46
    %v191 = vunpack.c.l.b16 %v47
    %v192 = vunpack.c.l.b16 %v48
    %v193 = vunpack.c.l.b16 %v49
    %v194 = vunpack.c.l.b16 %v50
    %v195 = vunpack.c.l.b16 %v51
    %v196 = vunpack.c.l.b16 %v52
    %v197 = vunpack.c.l.b16 %v53
    %v198 = vunpack.c.l.b16 %v54
    %v199 = vunpack.c.l.b16 %v55
    %v200 = vunpack.c.l.b16 %v56
    %v201 = vunpack.c.l.b16 %v57
    %v202 = vunpack.c.l.b16 %v58
    %v203 = vunpack.c.l.b16 %v59
    %v204 = vunpack.c.l.b16 %v60
    %v205 = vunpack.c.l.b16 %v61
    %v206 = vunpack.c.l.b16 %v62
    %v207 = vunpack.c.l.b16 %v63
    %v208 = vunpack.c.l.b16 %v64
    %v209 = vunpack.c.l.b16 %v65
    %v210 = vunpack.c.l.b16 %v66
    %v211 = vunpack.c.l.b16 %v67
    %v212 = vunpack.c.l.b16 %v68
    %v213 = vunpack.c.l.b16 %v69
    %v214 = vunpack.c.l.b16 %v70
    %v215 = vunpack.c.l.b16 %v71
    %v216 = vunpack.c.l.b16 %v72
    %v217 = vunpack.c.l.b16 %v73
    %v218 = vunpack.c.l.b16 %v74
    %v219 = vunpack.c.l.b16 %v75
    %v220 = vunpack.c.l.b16 %v76
    %v221 = vunpack.c.l.b16 %v77
    %v222 = vunpack.c.l.b16 %v78
    %v223 = vunpack.c.l.b16 %v79
    %v224 = vpack.c.b16 %v161, %v160
    %v225 = vpack.c.b16 %v163, %v162
    %v226 = vpack.c.b16 %v165, %v164
    %v227 = vpack.c.b16 %v167, %v166
    %v228 = vpack.c.b16 %v169, %v168
    %v229 = vpack.c.b16 %v171, %v170
    %v230 = vpack.c.b16 %v173, %v172
    %v231 = vpack.c.b16 %v175, %v174
    %v232 = vpack.c.b16 %v177, %v176
    %v233 = vpack.c.b16 %v179, %v178
    %v234 = vpack.c.b16 %v181, %v180
    %v235 = vpack.c.b16 %v183, %v182
    %v236 = vpack.c.b16 %v185, %v184
    %v237 = vpack.c.b16 %v187, %v186
    %v238 = vpack.c.b16 %v189, %v188
    %v239 = vpack.c.b16 %v191, %v190
    %v240 = vpack.c.b16 %v193, %v192
    %v241 = vpack.c.b16 %v195, %v194
    %v242 = vpack.c.b16 %v197, %v196
    %v243 = vpack.c.b16 %v199, %v198
    %v244 = vpack.c.b16 %v201, %v200
    %v245 = vpack.c.b16 %v203, %v202
    %v246 = vpack.c.b16 %v205, %v204
    %v247 = vpack.c.b16 %v207, %v206
    %v248 = vpack.c.b16 %v209, %v208
    %v249 = vpack.c.b16 %v211, %v210
    %v250 = vpack.c.b16 %v213, %v212
    %v251 = vpack.c.b16 %v215, %v214
    %v252 = vpack.c.b16 %v217, %v216
    %v253 = vpack.c.b16 %v219, %v218
    %v254 = vpack.c.b16 %v221, %v220
    %v255 = vpack.c.b16 %v223, %v222
    %v304 = vunpack.c.l.b16 %v80
    %v305 = vunpack.c.l.b16 %v81
    %v306 = vunpack.c.l.b16 %v82
    %v307 = vunpack.c.l.b16 %v83
    %v308 = vunpack.c.l.b16 %v84
    %v309 = vunpack.c.l.b16 %v85
    %v310 = vunpack.c.l.b16 %v86
    %v311 = vunpack.c.l.b16 %v87
    %v312 = vunpack.c.l.b16 %v88
    %v313 = vunpack.c.l.b16 %v89
    %v314 = vunpack.c.l.b16 %v90
    %v315 = vunpack.c.l.b16 %v91
    %v316 = vunpack.c.l.b16 %v92
    %v317 = vunpack.c.l.b16 %v93
    %v318 = vunpack.c.l.b16 %v94
    %v319 = vunpack.c.l.b16 %v95
    %v320 = vpack.c.b16 %v305, %v304
    %v321 = vpack.c.b16 %v307, %v306
    %v322 = vpack.c.b16 %v309, %v308
    %v323 = vpack.c.b16 %v311, %v310
    %v324 = vpack.c.b16 %v313, %v312
    %v325 = vpack.c.b16 %v315, %v314
    %v326 = vpack.c.b16 %v317, %v316
    %v327 = vpack.c.b16 %v319, %v318
    %336 = vmatprep.subr.bf16.mxu0 0
    %337 = vmatpush1.bf16.msra.mxu0 %v327
    %338 = vmatprep.subr.bf16.mxu0 0
    %339 = vmatpush1.bf16.msra.mxu0 %v326
    %340 = vmatprep.subr.bf16.mxu0 0
    %341 = vmatpush1.bf16.msra.mxu0 %v325
    %342 = vmatprep.subr.bf16.mxu0 0
    %343 = vmatpush1.bf16.msra.mxu0 %v324
    %344 = vmatprep.subr.bf16.mxu0 0
    %345 = vmatpush1.bf16.msra.mxu0 %v323
    %346 = vmatprep.subr.bf16.mxu0 0
    %347 = vmatpush1.bf16.msra.mxu0 %v322
    %348 = vmatprep.subr.bf16.mxu0 0
    %349 = vmatpush1.bf16.msra.mxu0 %v321
    %350 = vmatprep.subr.bf16.mxu0 0
    %351 = vmatpush1.bf16.msra.mxu0 %v320
    %352 = vmatprep.subr.bf16.mxu0 0
    %353 = vmatpush2.bf16.msra.mxu0 0
    %354 = vmatprep.subr.bf16.mxu0 0
    %355 = vmatpush2.bf16.msra.mxu0 0
    %356 = vmatprep.subr.bf16.mxu0 0
    %357 = vmatpush2.bf16.msra.mxu0 0
    %358 = vmatprep.subr.bf16.mxu0 0
    %359 = vmatpush2.bf16.msra.mxu0 0
    %360 = vmatprep.subr.bf16.mxu0 0
    %361 = vmatpush2.bf16.msra.mxu0 0
    %362 = vmatprep.subr.bf16.mxu0 0
    %363 = vmatpush2.bf16.msra.mxu0 0
    %364 = vmatprep.subr.bf16.mxu0 0
    %365 = vmatpush2.bf16.msra.mxu0 0
    %366 = vmatprep.subr.bf16.mxu0 0
    %367 = vmatpush2.bf16.msra.mxu0 0
    %368 = vmatprep.mubr.bf16.mxu0 0
    %369 = vmatmul.mubr.bf16.gmra.mxu0 %v224
    %v370 = vpop.f32.mrf.mxu0
    %v371 = vadd.f32 0.0, %v370
    %v372 = vpop.f32.mrf.mxu0
    %v373 = vpop.f32.mrf.mxu0
    %v374 = vadd.f32 0.0, %v373
    %v375 = vpop.f32.mrf.mxu0
    %376 = vmatprep.mubr.bf16.mxu0 0
    %377 = vmatmul.mubr.bf16.gmra.mxu0 %v225
    %v378 = vpop.f32.mrf.mxu0
    %v379 = vadd.f32 0.0, %v378
    %v380 = vpop.f32.mrf.mxu0
    %v381 = vpop.f32.mrf.mxu0
    %v382 = vadd.f32 0.0, %v381
    %v383 = vpop.f32.mrf.mxu0
    %384 = vmatprep.mubr.bf16.mxu0 0
    %385 = vmatmul.mubr.bf16.gmra.mxu0 %v226
    %v386 = vpop.f32.mrf.mxu0
    %v387 = vadd.f32 0.0, %v386
    %v388 = vpop.f32.mrf.mxu0
    %v389 = vpop.f32.mrf.mxu0
    %v390 = vadd.f32 0.0, %v389
    %v391 = vpop.f32.mrf.mxu0
    %392 = vmatprep.mubr.bf16.mxu0 0
    %393 = vmatmul.mubr.bf16.gmra.mxu0 %v227
    %v394 = vpop.f32.mrf.mxu0
    %v395 = vadd.f32 0.0, %v394
    %v396 = vpop.f32.mrf.mxu0
    %v397 = vpop.f32.mrf.mxu0
    %v398 = vadd.f32 0.0, %v397
    %v399 = vpop.f32.mrf.mxu0
    %400 = vmatprep.mubr.bf16.mxu0 0
    %401 = vmatmul.mubr.bf16.gmra.mxu0 %v228
    %v402 = vpop.f32.mrf.mxu0
    %v403 = vadd.f32 0.0, %v402
    %v404 = vpop.f32.mrf.mxu0
    %v405 = vpop.f32.mrf.mxu0
    %v406 = vadd.f32 0.0, %v405
    %v407 = vpop.f32.mrf.mxu0
    %408 = vmatprep.mubr.bf16.mxu0 0
    %409 = vmatmul.mubr.bf16.gmra.mxu0 %v229
    %v410 = vpop.f32.mrf.mxu0
    %v411 = vadd.f32 0.0, %v410
    %v412 = vpop.f32.mrf.mxu0
    %v413 = vpop.f32.mrf.mxu0
    %v414 = vadd.f32 0.0, %v413
    %v415 = vpop.f32.mrf.mxu0
    %416 = vmatprep.mubr.bf16.mxu0 0
    %417 = vmatmul.mubr.bf16.gmra.mxu0 %v230
    %v418 = vpop.f32.mrf.mxu0
    %v419 = vadd.f32 0.0, %v418
    %v420 = vpop.f32.mrf.mxu0
    %v421 = vpop.f32.mrf.mxu0
    %v422 = vadd.f32 0.0, %v421
    %v423 = vpop.f32.mrf.mxu0
    %424 = vmatprep.mubr.bf16.mxu0 0
    %425 = vmatmul.mubr.bf16.gmra.mxu0 %v231
    %v426 = vpop.f32.mrf.mxu0
    %v427 = vadd.f32 0.0, %v426
    %v428 = vpop.f32.mrf.mxu0
    %v429 = vpop.f32.mrf.mxu0
    %v430 = vadd.f32 0.0, %v429
    %v431 = vpop.f32.mrf.mxu0
    %432 = vmatprep.mubr.bf16.mxu0 0
    %433 = vmatmul.mubr.bf16.gmra.mxu0 %v232
    %v434 = vpop.f32.mrf.mxu0
    %v435 = vadd.f32 0.0, %v434
    %v436 = vpop.f32.mrf.mxu0
    %v437 = vpop.f32.mrf.mxu0
    %v438 = vadd.f32 0.0, %v437
    %v439 = vpop.f32.mrf.mxu0
    %440 = vmatprep.mubr.bf16.mxu0 0
    %441 = vmatmul.mubr.bf16.gmra.mxu0 %v233
    %v442 = vpop.f32.mrf.mxu0
    %v443 = vadd.f32 0.0, %v442
    %v444 = vpop.f32.mrf.mxu0
    %v445 = vpop.f32.mrf.mxu0
    %v446 = vadd.f32 0.0, %v445
    %v447 = vpop.f32.mrf.mxu0
    %448 = vmatprep.mubr.bf16.mxu0 0
    %449 = vmatmul.mubr.bf16.gmra.mxu0 %v234
    %v450 = vpop.f32.mrf.mxu0
    %v451 = vadd.f32 0.0, %v450
    %v452 = vpop.f32.mrf.mxu0
    %v453 = vpop.f32.mrf.mxu0
    %v454 = vadd.f32 0.0, %v453
    %v455 = vpop.f32.mrf.mxu0
    %456 = vmatprep.mubr.bf16.mxu0 0
    %457 = vmatmul.mubr.bf16.gmra.mxu0 %v235
    %v458 = vpop.f32.mrf.mxu0
    %v459 = vadd.f32 0.0, %v458
    %v460 = vpop.f32.mrf.mxu0
    %v461 = vpop.f32.mrf.mxu0
    %v462 = vadd.f32 0.0, %v461
    %v463 = vpop.f32.mrf.mxu0
    %464 = vmatprep.mubr.bf16.mxu0 0
    %465 = vmatmul.mubr.bf16.gmra.mxu0 %v236
    %v466 = vpop.f32.mrf.mxu0
    %v467 = vadd.f32 0.0, %v466
    %v468 = vpop.f32.mrf.mxu0
    %v469 = vpop.f32.mrf.mxu0
    %v470 = vadd.f32 0.0, %v469
    %v471 = vpop.f32.mrf.mxu0
    %472 = vmatprep.mubr.bf16.mxu0 0
    %473 = vmatmul.mubr.bf16.gmra.mxu0 %v237
    %v474 = vpop.f32.mrf.mxu0
    %v475 = vadd.f32 0.0, %v474
    %v476 = vpop.f32.mrf.mxu0
    %v477 = vpop.f32.mrf.mxu0
    %v478 = vadd.f32 0.0, %v477
    %v479 = vpop.f32.mrf.mxu0
    %480 = vmatprep.mubr.bf16.mxu0 0
    %481 = vmatmul.mubr.bf16.gmra.mxu0 %v238
    %v482 = vpop.f32.mrf.mxu0
    %v483 = vadd.f32 0.0, %v482
    %v484 = vpop.f32.mrf.mxu0
    %v485 = vpop.f32.mrf.mxu0
    %v486 = vadd.f32 0.0, %v485
    %v487 = vpop.f32.mrf.mxu0
    %488 = vmatprep.mubr.bf16.mxu0 0
    %489 = vmatmul.mubr.bf16.gmra.mxu0 %v239
    %v490 = vpop.f32.mrf.mxu0
    %v491 = vadd.f32 0.0, %v490
    %v492 = vpop.f32.mrf.mxu0
    %v493 = vpop.f32.mrf.mxu0
    %v494 = vadd.f32 0.0, %v493
    %v495 = vpop.f32.mrf.mxu0
    %496 = vmatprep.mubr.bf16.mxu0 0
    %497 = vmatmul.mubr.bf16.gmra.mxu0 %v240
    %v498 = vpop.f32.mrf.mxu0
    %v499 = vadd.f32 0.0, %v498
    %v500 = vpop.f32.mrf.mxu0
    %v501 = vpop.f32.mrf.mxu0
    %v502 = vadd.f32 0.0, %v501
    %v503 = vpop.f32.mrf.mxu0
    %504 = vmatprep.mubr.bf16.mxu0 0
    %505 = vmatmul.mubr.bf16.gmra.mxu0 %v241
    %v506 = vpop.f32.mrf.mxu0
    %v507 = vadd.f32 0.0, %v506
    %v508 = vpop.f32.mrf.mxu0
    %v509 = vpop.f32.mrf.mxu0
    %v510 = vadd.f32 0.0, %v509
    %v511 = vpop.f32.mrf.mxu0
    %512 = vmatprep.mubr.bf16.mxu0 0
    %513 = vmatmul.mubr.bf16.gmra.mxu0 %v242
    %v514 = vpop.f32.mrf.mxu0
    %v515 = vadd.f32 0.0, %v514
    %v516 = vpop.f32.mrf.mxu0
    %v517 = vpop.f32.mrf.mxu0
    %v518 = vadd.f32 0.0, %v517
    %v519 = vpop.f32.mrf.mxu0
    %520 = vmatprep.mubr.bf16.mxu0 0
    %521 = vmatmul.mubr.bf16.gmra.mxu0 %v243
    %v522 = vpop.f32.mrf.mxu0
    %v523 = vadd.f32 0.0, %v522
    %v524 = vpop.f32.mrf.mxu0
    %v525 = vpop.f32.mrf.mxu0
    %v526 = vadd.f32 0.0, %v525
    %v527 = vpop.f32.mrf.mxu0
    %528 = vmatprep.mubr.bf16.mxu0 0
    %529 = vmatmul.mubr.bf16.gmra.mxu0 %v244
    %v530 = vpop.f32.mrf.mxu0
    %v531 = vadd.f32 0.0, %v530
    %v532 = vpop.f32.mrf.mxu0
    %v533 = vpop.f32.mrf.mxu0
    %v534 = vadd.f32 0.0, %v533
    %v535 = vpop.f32.mrf.mxu0
    %536 = vmatprep.mubr.bf16.mxu0 0
    %537 = vmatmul.mubr.bf16.gmra.mxu0 %v245
    %v538 = vpop.f32.mrf.mxu0
    %v539 = vadd.f32 0.0, %v538
    %v540 = vpop.f32.mrf.mxu0
    %v541 = vpop.f32.mrf.mxu0
    %v542 = vadd.f32 0.0, %v541
    %v543 = vpop.f32.mrf.mxu0
    %544 = vmatprep.mubr.bf16.mxu0 0
    %545 = vmatmul.mubr.bf16.gmra.mxu0 %v246
    %v546 = vpop.f32.mrf.mxu0
    %v547 = vadd.f32 0.0, %v546
    %v548 = vpop.f32.mrf.mxu0
    %v549 = vpop.f32.mrf.mxu0
    %v550 = vadd.f32 0.0, %v549
    %v551 = vpop.f32.mrf.mxu0
    %552 = vmatprep.mubr.bf16.mxu0 0
    %553 = vmatmul.mubr.bf16.gmra.mxu0 %v247
    %v554 = vpop.f32.mrf.mxu0
    %v555 = vadd.f32 0.0, %v554
    %v556 = vpop.f32.mrf.mxu0
    %v557 = vpop.f32.mrf.mxu0
    %v558 = vadd.f32 0.0, %v557
    %v559 = vpop.f32.mrf.mxu0
    %560 = vmatprep.mubr.bf16.mxu0 0
    %561 = vmatmul.mubr.bf16.gmra.mxu0 %v248
    %v562 = vpop.f32.mrf.mxu0
    %v563 = vadd.f32 0.0, %v562
    %v564 = vpop.f32.mrf.mxu0
    %v565 = vpop.f32.mrf.mxu0
    %v566 = vadd.f32 0.0, %v565
    %v567 = vpop.f32.mrf.mxu0
    %568 = vmatprep.mubr.bf16.mxu0 0
    %569 = vmatmul.mubr.bf16.gmra.mxu0 %v249
    %v570 = vpop.f32.mrf.mxu0
    %v571 = vadd.f32 0.0, %v570
    %v572 = vpop.f32.mrf.mxu0
    %v573 = vpop.f32.mrf.mxu0
    %v574 = vadd.f32 0.0, %v573
    %v575 = vpop.f32.mrf.mxu0
    %576 = vmatprep.mubr.bf16.mxu0 0
    %577 = vmatmul.mubr.bf16.gmra.mxu0 %v250
    %v578 = vpop.f32.mrf.mxu0
    %v579 = vadd.f32 0.0, %v578
    %v580 = vpop.f32.mrf.mxu0
    %v581 = vpop.f32.mrf.mxu0
    %v582 = vadd.f32 0.0, %v581
    %v583 = vpop.f32.mrf.mxu0
    %584 = vmatprep.mubr.bf16.mxu0 0
    %585 = vmatmul.mubr.bf16.gmra.mxu0 %v251
    %v586 = vpop.f32.mrf.mxu0
    %v587 = vadd.f32 0.0, %v586
    %v588 = vpop.f32.mrf.mxu0
    %v589 = vpop.f32.mrf.mxu0
    %v590 = vadd.f32 0.0, %v589
    %v591 = vpop.f32.mrf.mxu0
    %592 = vmatprep.mubr.bf16.mxu0 0
    %593 = vmatmul.mubr.bf16.gmra.mxu0 %v252
    %v594 = vpop.f32.mrf.mxu0
    %v595 = vadd.f32 0.0, %v594
    %v596 = vpop.f32.mrf.mxu0
    %v597 = vpop.f32.mrf.mxu0
    %v598 = vadd.f32 0.0, %v597
    %v599 = vpop.f32.mrf.mxu0
    %600 = vmatprep.mubr.bf16.mxu0 0
    %601 = vmatmul.mubr.bf16.gmra.mxu0 %v253
    %v602 = vpop.f32.mrf.mxu0
    %v603 = vadd.f32 0.0, %v602
    %v604 = vpop.f32.mrf.mxu0
    %v605 = vpop.f32.mrf.mxu0
    %v606 = vadd.f32 0.0, %v605
    %v607 = vpop.f32.mrf.mxu0
    %608 = vmatprep.mubr.bf16.mxu0 0
    %609 = vmatmul.mubr.bf16.gmra.mxu0 %v254
    %v610 = vpop.f32.mrf.mxu0
    %v611 = vadd.f32 0.0, %v610
    %v612 = vpop.f32.mrf.mxu0
    %v613 = vpop.f32.mrf.mxu0
    %v614 = vadd.f32 0.0, %v613
    %v615 = vpop.f32.mrf.mxu0
    %616 = vmatprep.mubr.bf16.mxu0 0
    %617 = vmatmul.mubr.bf16.gmra.mxu0 %v255
    %v618 = vpop.f32.mrf.mxu0
    %v619 = vadd.f32 0.0, %v618
    %v620 = vpop.f32.mrf.mxu0
    %v621 = vpop.f32.mrf.mxu0
    %v622 = vadd.f32 0.0, %v621
    %v623 = vpop.f32.mrf.mxu0
    %624 = vdwg.mxu0
    %p625 = scmp.eq.s32.totalorder 0, 0
    // Predicated region
    $region14: #{ppm_forward.1} parent=1 // pred_check
      %p626 = pneg %p625
    $region15: #{ppm_forward.1} parent=1 // pred_check_branch
      %628 = sbr.rel (%p626) target = $region17
    $region16: #{ppm_forward.1} parent=1 // pred_region
      %629 = vst [vmem:[#allocation2] sm:$0xff] %v371
      %630 = vst [vmem:[#allocation2 + $0x8] sm:$0xff] %v374
      %631 = vst [vmem:[#allocation2 + $0x10] sm:$0xff] %v379
      %632 = vst [vmem:[#allocation2 + $0x18] sm:$0xff] %v382
      %633 = vst [vmem:[#allocation2 + $0x20] sm:$0xff] %v387
      %634 = vst [vmem:[#allocation2 + $0x28] sm:$0xff] %v390
      %635 = vst [vmem:[#allocation2 + $0x30] sm:$0xff] %v395
      %636 = vst [vmem:[#allocation2 + $0x38] sm:$0xff] %v398
      %637 = vst [vmem:[#allocation2 + $0x40] sm:$0xff] %v403
      %638 = vst [vmem:[#allocation2 + $0x48] sm:$0xff] %v406
      %639 = vst [vmem:[#allocation2 + $0x50] sm:$0xff] %v411
      %640 = vst [vmem:[#allocation2 + $0x58] sm:$0xff] %v414
      %641 = vst [vmem:[#allocation2 + $0x60] sm:$0xff] %v419
      %642 = vst [vmem:[#allocation2 + $0x68] sm:$0xff] %v422
      %643 = vst [vmem:[#allocation2 + $0x70] sm:$0xff] %v427
      %644 = vst [vmem:[#allocation2 + $0x78] sm:$0xff] %v430
      %645 = vst [vmem:[#allocation2 + $0x80] sm:$0xff] %v435
      %646 = vst [vmem:[#allocation2 + $0x88] sm:$0xff] %v438
      %647 = vst [vmem:[#allocation2 + $0x90] sm:$0xff] %v443
      %648 = vst [vmem:[#allocation2 + $0x98] sm:$0xff] %v446
      %649 = vst [vmem:[#allocation2 + $0xa0] sm:$0xff] %v451
      %650 = vst [vmem:[#allocation2 + $0xa8] sm:$0xff] %v454
      %651 = vst [vmem:[#allocation2 + $0xb0] sm:$0xff] %v459
      %652 = vst [vmem:[#allocation2 + $0xb8] sm:$0xff] %v462
      %653 = vst [vmem:[#allocation2 + $0xc0] sm:$0xff] %v467
      %654 = vst [vmem:[#allocation2 + $0xc8] sm:$0xff] %v470
      %655 = vst [vmem:[#allocation2 + $0xd0] sm:$0xff] %v475
      %656 = vst [vmem:[#allocation2 + $0xd8] sm:$0xff] %v478
      %657 = vst [vmem:[#allocation2 + $0xe0] sm:$0xff] %v483
      %658 = vst [vmem:[#allocation2 + $0xe8] sm:$0xff] %v486
      %659 = vst [vmem:[#allocation2 + $0xf0] sm:$0xff] %v491
      %660 = vst [vmem:[#allocation2 + $0xf8] sm:$0xff] %v494
      %661 = vst [vmem:[#allocation2 + $0x100] sm:$0xff] %v499
      %662 = vst [vmem:[#allocation2 + $0x108] sm:$0xff] %v502
      %663 = vst [vmem:[#allocation2 + $0x110] sm:$0xff] %v507
      %664 = vst [vmem:[#allocation2 + $0x118] sm:$0xff] %v510
      %665 = vst [vmem:[#allocation2 + $0x120] sm:$0xff] %v515
      %666 = vst [vmem:[#allocation2 + $0x128] sm:$0xff] %v518
      %667 = vst [vmem:[#allocation2 + $0x130] sm:$0xff] %v523
      %668 = vst [vmem:[#allocation2 + $0x138] sm:$0xff] %v526
      %669 = vst [vmem:[#allocation2 + $0x140] sm:$0xff] %v531
      %670 = vst [vmem:[#allocation2 + $0x148] sm:$0xff] %v534
      %671 = vst [vmem:[#allocation2 + $0x150] sm:$0xff] %v539
      %672 = vst [vmem:[#allocation2 + $0x158] sm:$0xff] %v542
      %673 = vst [vmem:[#allocation2 + $0x160] sm:$0xff] %v547
      %674 = vst [vmem:[#allocation2 + $0x168] sm:$0xff] %v550
      %675 = vst [vmem:[#allocation2 + $0x170] sm:$0xff] %v555
      %676 = vst [vmem:[#allocation2 + $0x178] sm:$0xff] %v558
      %677 = vst [vmem:[#allocation2 + $0x180] sm:$0xff] %v563
      %678 = vst [vmem:[#allocation2 + $0x188] sm:$0xff] %v566
      %679 = vst [vmem:[#allocation2 + $0x190] sm:$0xff] %v571
      %680 = vst [vmem:[#allocation2 + $0x198] sm:$0xff] %v574
      %681 = vst [vmem:[#allocation2 + $0x1a0] sm:$0xff] %v579
      %682 = vst [vmem:[#allocation2 + $0x1a8] sm:$0xff] %v582
      %683 = vst [vmem:[#allocation2 + $0x1b0] sm:$0xff] %v587
      %684 = vst [vmem:[#allocation2 + $0x1b8] sm:$0xff] %v590
      %685 = vst [vmem:[#allocation2 + $0x1c0] sm:$0xff] %v595
      %686 = vst [vmem:[#allocation2 + $0x1c8] sm:$0xff] %v598
      %687 = vst [vmem:[#allocation2 + $0x1d0] sm:$0xff] %v603
      %688 = vst [vmem:[#allocation2 + $0x1d8] sm:$0xff] %v606
      %689 = vst [vmem:[#allocation2 + $0x1e0] sm:$0xff] %v611
      %690 = vst [vmem:[#allocation2 + $0x1e8] sm:$0xff] %v614
      %691 = vst [vmem:[#allocation2 + $0x1f0] sm:$0xff] %v619
      %692 = vst [vmem:[#allocation2 + $0x1f8] sm:$0xff] %v622
    $region17: #{ppm_forward.1} parent=1 // pred_fallthru
      _
    %p693 = scmp.gt.s32.totalorder 0, 0
    // Predicated region
    $region18: #{ppm_forward.1} parent=1 // pred_check
      %p694 = pneg %p693
    $region19: #{ppm_forward.1} parent=1 // pred_check_branch
      %696 = sbr.rel (%p694) target = $region21
    $region20: #{ppm_forward.1} parent=1 // pred_region
      %v697 = vld [vmem:[#allocation2] sm:$0xff]
      %v698 = vld [vmem:[#allocation2 + $0x8] sm:$0xff]
      %v699 = vld [vmem:[#allocation2 + $0x10] sm:$0xff]
      %v700 = vld [vmem:[#allocation2 + $0x18] sm:$0xff]
      %v701 = vld [vmem:[#allocation2 + $0x20] sm:$0xff]
      %v702 = vld [vmem:[#allocation2 + $0x28] sm:$0xff]
      %v703 = vld [vmem:[#allocation2 + $0x30] sm:$0xff]
      %v704 = vld [vmem:[#allocation2 + $0x38] sm:$0xff]
      %v705 = vld [vmem:[#allocation2 + $0x40] sm:$0xff]
      %v706 = vld [vmem:[#allocation2 + $0x48] sm:$0xff]
      %v707 = vld [vmem:[#allocation2 + $0x50] sm:$0xff]
      %v708 = vld [vmem:[#allocation2 + $0x58] sm:$0xff]
      %v709 = vld [vmem:[#allocation2 + $0x60] sm:$0xff]
      %v710 = vld [vmem:[#allocation2 + $0x68] sm:$0xff]
      %v711 = vld [vmem:[#allocation2 + $0x70] sm:$0xff]
      %v712 = vld [vmem:[#allocation2 + $0x78] sm:$0xff]
      %v713 = vld [vmem:[#allocation2 + $0x80] sm:$0xff]
      %v714 = vld [vmem:[#allocation2 + $0x88] sm:$0xff]
      %v715 = vld [vmem:[#allocation2 + $0x90] sm:$0xff]
      %v716 = vld [vmem:[#allocation2 + $0x98] sm:$0xff]
      %v717 = vld [vmem:[#allocation2 + $0xa0] sm:$0xff]
      %v718 = vld [vmem:[#allocation2 + $0xa8] sm:$0xff]
      %v719 = vld [vmem:[#allocation2 + $0xb0] sm:$0xff]
      %v720 = vld [vmem:[#allocation2 + $0xb8] sm:$0xff]
      %v721 = vld [vmem:[#allocation2 + $0xc0] sm:$0xff]
      %v722 = vld [vmem:[#allocation2 + $0xc8] sm:$0xff]
      %v723 = vld [vmem:[#allocation2 + $0xd0] sm:$0xff]
      %v724 = vld [vmem:[#allocation2 + $0xd8] sm:$0xff]
      %v725 = vld [vmem:[#allocation2 + $0xe0] sm:$0xff]
      %v726 = vld [vmem:[#allocation2 + $0xe8] sm:$0xff]
      %v727 = vld [vmem:[#allocation2 + $0xf0] sm:$0xff]
      %v728 = vld [vmem:[#allocation2 + $0xf8] sm:$0xff]
      %v729 = vld [vmem:[#allocation2 + $0x100] sm:$0xff]
      %v730 = vld [vmem:[#allocation2 + $0x108] sm:$0xff]
      %v731 = vld [vmem:[#allocation2 + $0x110] sm:$0xff]
      %v732 = vld [vmem:[#allocation2 + $0x118] sm:$0xff]
      %v733 = vld [vmem:[#allocation2 + $0x120] sm:$0xff]
      %v734 = vld [vmem:[#allocation2 + $0x128] sm:$0xff]
      %v735 = vld [vmem:[#allocation2 + $0x130] sm:$0xff]
      %v736 = vld [vmem:[#allocation2 + $0x138] sm:$0xff]
      %v737 = vld [vmem:[#allocation2 + $0x140] sm:$0xff]
      %v738 = vld [vmem:[#allocation2 + $0x148] sm:$0xff]
      %v739 = vld [vmem:[#allocation2 + $0x150] sm:$0xff]
      %v740 = vld [vmem:[#allocation2 + $0x158] sm:$0xff]
      %v741 = vld [vmem:[#allocation2 + $0x160] sm:$0xff]
      %v742 = vld [vmem:[#allocation2 + $0x168] sm:$0xff]
      %v743 = vld [vmem:[#allocation2 + $0x170] sm:$0xff]
      %v744 = vld [vmem:[#allocation2 + $0x178] sm:$0xff]
      %v745 = vld [vmem:[#allocation2 + $0x180] sm:$0xff]
      %v746 = vld [vmem:[#allocation2 + $0x188] sm:$0xff]
      %v747 = vld [vmem:[#allocation2 + $0x190] sm:$0xff]
      %v748 = vld [vmem:[#allocation2 + $0x198] sm:$0xff]
      %v749 = vld [vmem:[#allocation2 + $0x1a0] sm:$0xff]
      %v750 = vld [vmem:[#allocation2 + $0x1a8] sm:$0xff]
      %v751 = vld [vmem:[#allocation2 + $0x1b0] sm:$0xff]
      %v752 = vld [vmem:[#allocation2 + $0x1b8] sm:$0xff]
      %v753 = vld [vmem:[#allocation2 + $0x1c0] sm:$0xff]
      %v754 = vld [vmem:[#allocation2 + $0x1c8] sm:$0xff]
      %v755 = vld [vmem:[#allocation2 + $0x1d0] sm:$0xff]
      %v756 = vld [vmem:[#allocation2 + $0x1d8] sm:$0xff]
      %v757 = vld [vmem:[#allocation2 + $0x1e0] sm:$0xff]
      %v758 = vld [vmem:[#allocation2 + $0x1e8] sm:$0xff]
      %v759 = vld [vmem:[#allocation2 + $0x1f0] sm:$0xff]
      %v760 = vld [vmem:[#allocation2 + $0x1f8] sm:$0xff]
      %v761 = vadd.f32 %v697, %v371
      %v762 = vadd.f32 %v698, %v374
      %v763 = vadd.f32 %v699, %v379
      %v764 = vadd.f32 %v700, %v382
      %v765 = vadd.f32 %v701, %v387
      %v766 = vadd.f32 %v702, %v390
      %v767 = vadd.f32 %v703, %v395
      %v768 = vadd.f32 %v704, %v398
      %v769 = vadd.f32 %v705, %v403
      %v770 = vadd.f32 %v706, %v406
      %v771 = vadd.f32 %v707, %v411
      %v772 = vadd.f32 %v708, %v414
      %v773 = vadd.f32 %v709, %v419
      %v774 = vadd.f32 %v710, %v422
      %v775 = vadd.f32 %v711, %v427
      %v776 = vadd.f32 %v712, %v430
      %v777 = vadd.f32 %v713, %v435
      %v778 = vadd.f32 %v714, %v438
      %v779 = vadd.f32 %v715, %v443
      %v780 = vadd.f32 %v716, %v446
      %v781 = vadd.f32 %v717, %v451
      %v782 = vadd.f32 %v718, %v454
      %v783 = vadd.f32 %v719, %v459
      %v784 = vadd.f32 %v720, %v462
      %v785 = vadd.f32 %v721, %v467
      %v786 = vadd.f32 %v722, %v470
      %v787 = vadd.f32 %v723, %v475
      %v788 = vadd.f32 %v724, %v478
      %v789 = vadd.f32 %v725, %v483
      %v790 = vadd.f32 %v726, %v486
      %v791 = vadd.f32 %v727, %v491
      %v792 = vadd.f32 %v728, %v494
      %v793 = vadd.f32 %v729, %v499
      %v794 = vadd.f32 %v730, %v502
      %v795 = vadd.f32 %v731, %v507
      %v796 = vadd.f32 %v732, %v510
      %v797 = vadd.f32 %v733, %v515
      %v798 = vadd.f32 %v734, %v518
      %v799 = vadd.f32 %v735, %v523
      %v800 = vadd.f32 %v736, %v526
      %v801 = vadd.f32 %v737, %v531
      %v802 = vadd.f32 %v738, %v534
      %v803 = vadd.f32 %v739, %v539
      %v804 = vadd.f32 %v740, %v542
      %v805 = vadd.f32 %v741, %v547
      %v806 = vadd.f32 %v742, %v550
      %v807 = vadd.f32 %v743, %v555
      %v808 = vadd.f32 %v744, %v558
      %v809 = vadd.f32 %v745, %v563
      %v810 = vadd.f32 %v746, %v566
      %v811 = vadd.f32 %v747, %v571
      %v812 = vadd.f32 %v748, %v574
      %v813 = vadd.f32 %v749, %v579
      %v814 = vadd.f32 %v750, %v582
      %v815 = vadd.f32 %v751, %v587
      %v816 = vadd.f32 %v752, %v590
      %v817 = vadd.f32 %v753, %v595
      %v818 = vadd.f32 %v754, %v598
      %v819 = vadd.f32 %v755, %v603
      %v820 = vadd.f32 %v756, %v606
      %v821 = vadd.f32 %v757, %v611
      %v822 = vadd.f32 %v758, %v614
      %v823 = vadd.f32 %v759, %v619
      %v824 = vadd.f32 %v760, %v622
      %825 = vst [vmem:[#allocation2] sm:$0xff] %v761
      %826 = vst [vmem:[#allocation2 + $0x8] sm:$0xff] %v762
      %827 = vst [vmem:[#allocation2 + $0x10] sm:$0xff] %v763
      %828 = vst [vmem:[#allocation2 + $0x18] sm:$0xff] %v764
      %829 = vst [vmem:[#allocation2 + $0x20] sm:$0xff] %v765
      %830 = vst [vmem:[#allocation2 + $0x28] sm:$0xff] %v766
      %831 = vst [vmem:[#allocation2 + $0x30] sm:$0xff] %v767
      %832 = vst [vmem:[#allocation2 + $0x38] sm:$0xff] %v768
      %833 = vst [vmem:[#allocation2 + $0x40] sm:$0xff] %v769
      %834 = vst [vmem:[#allocation2 + $0x48] sm:$0xff] %v770
      %835 = vst [vmem:[#allocation2 + $0x50] sm:$0xff] %v771
      %836 = vst [vmem:[#allocation2 + $0x58] sm:$0xff] %v772
      %837 = vst [vmem:[#allocation2 + $0x60] sm:$0xff] %v773
      %838 = vst [vmem:[#allocation2 + $0x68] sm:$0xff] %v774
      %839 = vst [vmem:[#allocation2 + $0x70] sm:$0xff] %v775
      %840 = vst [vmem:[#allocation2 + $0x78] sm:$0xff] %v776
      %841 = vst [vmem:[#allocation2 + $0x80] sm:$0xff] %v777
      %842 = vst [vmem:[#allocation2 + $0x88] sm:$0xff] %v778
      %843 = vst [vmem:[#allocation2 + $0x90] sm:$0xff] %v779
      %844 = vst [vmem:[#allocation2 + $0x98] sm:$0xff] %v780
      %845 = vst [vmem:[#allocation2 + $0xa0] sm:$0xff] %v781
      %846 = vst [vmem:[#allocation2 + $0xa8] sm:$0xff] %v782
      %847 = vst [vmem:[#allocation2 + $0xb0] sm:$0xff] %v783
      %848 = vst [vmem:[#allocation2 + $0xb8] sm:$0xff] %v784
      %849 = vst [vmem:[#allocation2 + $0xc0] sm:$0xff] %v785
      %850 = vst [vmem:[#allocation2 + $0xc8] sm:$0xff] %v786
      %851 = vst [vmem:[#allocation2 + $0xd0] sm:$0xff] %v787
      %852 = vst [vmem:[#allocation2 + $0xd8] sm:$0xff] %v788
      %853 = vst [vmem:[#allocation2 + $0xe0] sm:$0xff] %v789
      %854 = vst [vmem:[#allocation2 + $0xe8] sm:$0xff] %v790
      %855 = vst [vmem:[#allocation2 + $0xf0] sm:$0xff] %v791
      %856 = vst [vmem:[#allocation2 + $0xf8] sm:$0xff] %v792
      %857 = vst [vmem:[#allocation2 + $0x100] sm:$0xff] %v793
      %858 = vst [vmem:[#allocation2 + $0x108] sm:$0xff] %v794
      %859 = vst [vmem:[#allocation2 + $0x110] sm:$0xff] %v795
      %860 = vst [vmem:[#allocation2 + $0x118] sm:$0xff] %v796
      %861 = vst [vmem:[#allocation2 + $0x120] sm:$0xff] %v797
      %862 = vst [vmem:[#allocation2 + $0x128] sm:$0xff] %v798
      %863 = vst [vmem:[#allocation2 + $0x130] sm:$0xff] %v799
      %864 = vst [vmem:[#allocation2 + $0x138] sm:$0xff] %v800
      %865 = vst [vmem:[#allocation2 + $0x140] sm:$0xff] %v801
      %866 = vst [vmem:[#allocation2 + $0x148] sm:$0xff] %v802
      %867 = vst [vmem:[#allocation2 + $0x150] sm:$0xff] %v803
      %868 = vst [vmem:[#allocation2 + $0x158] sm:$0xff] %v804
      %869 = vst [vmem:[#allocation2 + $0x160] sm:$0xff] %v805
      %870 = vst [vmem:[#allocation2 + $0x168] sm:$0xff] %v806
      %871 = vst [vmem:[#allocation2 + $0x170] sm:$0xff] %v807
      %872 = vst [vmem:[#allocation2 + $0x178] sm:$0xff] %v808
      %873 = vst [vmem:[#allocation2 + $0x180] sm:$0xff] %v809
      %874 = vst [vmem:[#allocation2 + $0x188] sm:$0xff] %v810
      %875 = vst [vmem:[#allocation2 + $0x190] sm:$0xff] %v811
      %876 = vst [vmem:[#allocation2 + $0x198] sm:$0xff] %v812
      %877 = vst [vmem:[#allocation2 + $0x1a0] sm:$0xff] %v813
      %878 = vst [vmem:[#allocation2 + $0x1a8] sm:$0xff] %v814
      %879 = vst [vmem:[#allocation2 + $0x1b0] sm:$0xff] %v815
      %880 = vst [vmem:[#allocation2 + $0x1b8] sm:$0xff] %v816
      %881 = vst [vmem:[#allocation2 + $0x1c0] sm:$0xff] %v817
      %882 = vst [vmem:[#allocation2 + $0x1c8] sm:$0xff] %v818
      %883 = vst [vmem:[#allocation2 + $0x1d0] sm:$0xff] %v819
      %884 = vst [vmem:[#allocation2 + $0x1d8] sm:$0xff] %v820
      %885 = vst [vmem:[#allocation2 + $0x1e0] sm:$0xff] %v821
      %886 = vst [vmem:[#allocation2 + $0x1e8] sm:$0xff] %v822
      %887 = vst [vmem:[#allocation2 + $0x1f0] sm:$0xff] %v823
      %888 = vst [vmem:[#allocation2 + $0x1f8] sm:$0xff] %v824
    $region21: #{ppm_forward.1} parent=1 // pred_fallthru
      _
    // Predicated region
    $region22: #{ppm_forward.1} parent=1 // pred_check
      %p889 = pneg %p625
    $region23: #{ppm_forward.1} parent=1 // pred_check_branch
      %891 = sbr.rel (%p889) target = $region25
    $region24: #{ppm_forward.1} parent=1 // pred_region
      %v892 = vld [vmem:[#allocation2] sm:$0xff]
      %v893 = vld [vmem:[#allocation2 + $0x8] sm:$0xff]
      %v894 = vld [vmem:[#allocation2 + $0x10] sm:$0xff]
      %v895 = vld [vmem:[#allocation2 + $0x18] sm:$0xff]
      %v896 = vld [vmem:[#allocation2 + $0x20] sm:$0xff]
      %v897 = vld [vmem:[#allocation2 + $0x28] sm:$0xff]
      %v898 = vld [vmem:[#allocation2 + $0x30] sm:$0xff]
      %v899 = vld [vmem:[#allocation2 + $0x38] sm:$0xff]
      %v900 = vld [vmem:[#allocation2 + $0x40] sm:$0xff]
      %v901 = vld [vmem:[#allocation2 + $0x48] sm:$0xff]
      %v902 = vld [vmem:[#allocation2 + $0x50] sm:$0xff]
      %v903 = vld [vmem:[#allocation2 + $0x58] sm:$0xff]
      %v904 = vld [vmem:[#allocation2 + $0x60] sm:$0xff]
      %v905 = vld [vmem:[#allocation2 + $0x68] sm:$0xff]
      %v906 = vld [vmem:[#allocation2 + $0x70] sm:$0xff]
      %v907 = vld [vmem:[#allocation2 + $0x78] sm:$0xff]
      %v908 = vld [vmem:[#allocation2 + $0x80] sm:$0xff]
      %v909 = vld [vmem:[#allocation2 + $0x88] sm:$0xff]
      %v910 = vld [vmem:[#allocation2 + $0x90] sm:$0xff]
      %v911 = vld [vmem:[#allocation2 + $0x98] sm:$0xff]
      %v912 = vld [vmem:[#allocation2 + $0xa0] sm:$0xff]
      %v913 = vld [vmem:[#allocation2 + $0xa8] sm:$0xff]
      %v914 = vld [vmem:[#allocation2 + $0xb0] sm:$0xff]
      %v915 = vld [vmem:[#allocation2 + $0xb8] sm:$0xff]
      %v916 = vld [vmem:[#allocation2 + $0xc0] sm:$0xff]
      %v917 = vld [vmem:[#allocation2 + $0xc8] sm:$0xff]
      %v918 = vld [vmem:[#allocation2 + $0xd0] sm:$0xff]
      %v919 = vld [vmem:[#allocation2 + $0xd8] sm:$0xff]
      %v920 = vld [vmem:[#allocation2 + $0xe0] sm:$0xff]
      %v921 = vld [vmem:[#allocation2 + $0xe8] sm:$0xff]
      %v922 = vld [vmem:[#allocation2 + $0xf0] sm:$0xff]
      %v923 = vld [vmem:[#allocation2 + $0xf8] sm:$0xff]
      %v924 = vld [vmem:[#allocation2 + $0x100] sm:$0xff]
      %v925 = vld [vmem:[#allocation2 + $0x108] sm:$0xff]
      %v926 = vld [vmem:[#allocation2 + $0x110] sm:$0xff]
      %v927 = vld [vmem:[#allocation2 + $0x118] sm:$0xff]
      %v928 = vld [vmem:[#allocation2 + $0x120] sm:$0xff]
      %v929 = vld [vmem:[#allocation2 + $0x128] sm:$0xff]
      %v930 = vld [vmem:[#allocation2 + $0x130] sm:$0xff]
      %v931 = vld [vmem:[#allocation2 + $0x138] sm:$0xff]
      %v932 = vld [vmem:[#allocation2 + $0x140] sm:$0xff]
      %v933 = vld [vmem:[#allocation2 + $0x148] sm:$0xff]
      %v934 = vld [vmem:[#allocation2 + $0x150] sm:$0xff]
      %v935 = vld [vmem:[#allocation2 + $0x158] sm:$0xff]
      %v936 = vld [vmem:[#allocation2 + $0x160] sm:$0xff]
      %v937 = vld [vmem:[#allocation2 + $0x168] sm:$0xff]
      %v938 = vld [vmem:[#allocation2 + $0x170] sm:$0xff]
      %v939 = vld [vmem:[#allocation2 + $0x178] sm:$0xff]
      %v940 = vld [vmem:[#allocation2 + $0x180] sm:$0xff]
      %v941 = vld [vmem:[#allocation2 + $0x188] sm:$0xff]
      %v942 = vld [vmem:[#allocation2 + $0x190] sm:$0xff]
      %v943 = vld [vmem:[#allocation2 + $0x198] sm:$0xff]
      %v944 = vld [vmem:[#allocation2 + $0x1a0] sm:$0xff]
      %v945 = vld [vmem:[#allocation2 + $0x1a8] sm:$0xff]
      %v946 = vld [vmem:[#allocation2 + $0x1b0] sm:$0xff]
      %v947 = vld [vmem:[#allocation2 + $0x1b8] sm:$0xff]
      %v948 = vld [vmem:[#allocation2 + $0x1c0] sm:$0xff]
      %v949 = vld [vmem:[#allocation2 + $0x1c8] sm:$0xff]
      %v950 = vld [vmem:[#allocation2 + $0x1d0] sm:$0xff]
      %v951 = vld [vmem:[#allocation2 + $0x1d8] sm:$0xff]
      %v952 = vld [vmem:[#allocation2 + $0x1e0] sm:$0xff]
      %v953 = vld [vmem:[#allocation2 + $0x1e8] sm:$0xff]
      %v954 = vld [vmem:[#allocation2 + $0x1f0] sm:$0xff]
      %v955 = vld [vmem:[#allocation2 + $0x1f8] sm:$0xff]
      %v956 = vld [vmem:[%s2] sm:$0x1]
      %v958 = vlaneseq
      %v959 = vshrl.u32 %v958, 7
      %v960 = vsub.s32 0, %v959
      %v961 = vrot.slane %v956, %v960
      %v963 = vadd.f32 %v892, %v961
      %v964 = vadd.f32 %v893, %v961
      %v965 = vadd.f32 %v894, %v961
      %v966 = vadd.f32 %v895, %v961
      %v967 = vadd.f32 %v896, %v961
      %v968 = vadd.f32 %v897, %v961
      %v969 = vadd.f32 %v898, %v961
      %v970 = vadd.f32 %v899, %v961
      %v971 = vadd.f32 %v900, %v961
      %v972 = vadd.f32 %v901, %v961
      %v973 = vadd.f32 %v902, %v961
      %v974 = vadd.f32 %v903, %v961
      %v975 = vadd.f32 %v904, %v961
      %v976 = vadd.f32 %v905, %v961
      %v977 = vadd.f32 %v906, %v961
      %v978 = vadd.f32 %v907, %v961
      %v979 = vadd.f32 %v908, %v961
      %v980 = vadd.f32 %v909, %v961
      %v981 = vadd.f32 %v910, %v961
      %v982 = vadd.f32 %v911, %v961
      %v983 = vadd.f32 %v912, %v961
      %v984 = vadd.f32 %v913, %v961
      %v985 = vadd.f32 %v914, %v961
      %v986 = vadd.f32 %v915, %v961
      %v987 = vadd.f32 %v916, %v961
      %v988 = vadd.f32 %v917, %v961
      %v989 = vadd.f32 %v918, %v961
      %v990 = vadd.f32 %v919, %v961
      %v991 = vadd.f32 %v920, %v961
      %v992 = vadd.f32 %v921, %v961
      %v993 = vadd.f32 %v922, %v961
      %v994 = vadd.f32 %v923, %v961
      %v995 = vadd.f32 %v924, %v961
      %v996 = vadd.f32 %v925, %v961
      %v997 = vadd.f32 %v926, %v961
      %v998 = vadd.f32 %v927, %v961
      %v999 = vadd.f32 %v928, %v961
      %v1000 = vadd.f32 %v929, %v961
      %v1001 = vadd.f32 %v930, %v961
      %v1002 = vadd.f32 %v931, %v961
      %v1003 = vadd.f32 %v932, %v961
      %v1004 = vadd.f32 %v933, %v961
      %v1005 = vadd.f32 %v934, %v961
      %v1006 = vadd.f32 %v935, %v961
      %v1007 = vadd.f32 %v936, %v961
      %v1008 = vadd.f32 %v937, %v961
      %v1009 = vadd.f32 %v938, %v961
      %v1010 = vadd.f32 %v939, %v961
      %v1011 = vadd.f32 %v940, %v961
      %v1012 = vadd.f32 %v941, %v961
      %v1013 = vadd.f32 %v942, %v961
      %v1014 = vadd.f32 %v943, %v961
      %v1015 = vadd.f32 %v944, %v961
      %v1016 = vadd.f32 %v945, %v961
      %v1017 = vadd.f32 %v946, %v961
      %v1018 = vadd.f32 %v947, %v961
      %v1019 = vadd.f32 %v948, %v961
      %v1020 = vadd.f32 %v949, %v961
      %v1021 = vadd.f32 %v950, %v961
      %v1022 = vadd.f32 %v951, %v961
      %v1023 = vadd.f32 %v952, %v961
      %v1024 = vadd.f32 %v953, %v961
      %v1025 = vadd.f32 %v954, %v961
      %v1026 = vadd.f32 %v955, %v961
      %v1027 = vmax.f32 %v963, 0.0
      %v1028 = vmax.f32 %v964, 0.0
      %v1029 = vmax.f32 %v965, 0.0
      %v1030 = vmax.f32 %v966, 0.0
      %v1031 = vmax.f32 %v967, 0.0
      %v1032 = vmax.f32 %v968, 0.0
      %v1033 = vmax.f32 %v969, 0.0
      %v1034 = vmax.f32 %v970, 0.0
      %v1035 = vmax.f32 %v971, 0.0
      %v1036 = vmax.f32 %v972, 0.0
      %v1037 = vmax.f32 %v973, 0.0
      %v1038 = vmax.f32 %v974, 0.0
      %v1039 = vmax.f32 %v975, 0.0
      %v1040 = vmax.f32 %v976, 0.0
      %v1041 = vmax.f32 %v977, 0.0
      %v1042 = vmax.f32 %v978, 0.0
      %v1043 = vmax.f32 %v979, 0.0
      %v1044 = vmax.f32 %v980, 0.0
      %v1045 = vmax.f32 %v981, 0.0
      %v1046 = vmax.f32 %v982, 0.0
      %v1047 = vmax.f32 %v983, 0.0
      %v1048 = vmax.f32 %v984, 0.0
      %v1049 = vmax.f32 %v985, 0.0
      %v1050 = vmax.f32 %v986, 0.0
      %v1051 = vmax.f32 %v987, 0.0
      %v1052 = vmax.f32 %v988, 0.0
      %v1053 = vmax.f32 %v989, 0.0
      %v1054 = vmax.f32 %v990, 0.0
      %v1055 = vmax.f32 %v991, 0.0
      %v1056 = vmax.f32 %v992, 0.0
      %v1057 = vmax.f32 %v993, 0.0
      %v1058 = vmax.f32 %v994, 0.0
      %v1059 = vmax.f32 %v995, 0.0
      %v1060 = vmax.f32 %v996, 0.0
      %v1061 = vmax.f32 %v997, 0.0
      %v1062 = vmax.f32 %v998, 0.0
      %v1063 = vmax.f32 %v999, 0.0
      %v1064 = vmax.f32 %v1000, 0.0
      %v1065 = vmax.f32 %v1001, 0.0
      %v1066 = vmax.f32 %v1002, 0.0
      %v1067 = vmax.f32 %v1003, 0.0
      %v1068 = vmax.f32 %v1004, 0.0
      %v1069 = vmax.f32 %v1005, 0.0
      %v1070 = vmax.f32 %v1006, 0.0
      %v1071 = vmax.f32 %v1007, 0.0
      %v1072 = vmax.f32 %v1008, 0.0
      %v1073 = vmax.f32 %v1009, 0.0
      %v1074 = vmax.f32 %v1010, 0.0
      %v1075 = vmax.f32 %v1011, 0.0
      %v1076 = vmax.f32 %v1012, 0.0
      %v1077 = vmax.f32 %v1013, 0.0
      %v1078 = vmax.f32 %v1014, 0.0
      %v1079 = vmax.f32 %v1015, 0.0
      %v1080 = vmax.f32 %v1016, 0.0
      %v1081 = vmax.f32 %v1017, 0.0
      %v1082 = vmax.f32 %v1018, 0.0
      %v1083 = vmax.f32 %v1019, 0.0
      %v1084 = vmax.f32 %v1020, 0.0
      %v1085 = vmax.f32 %v1021, 0.0
      %v1086 = vmax.f32 %v1022, 0.0
      %v1087 = vmax.f32 %v1023, 0.0
      %v1088 = vmax.f32 %v1024, 0.0
      %v1089 = vmax.f32 %v1025, 0.0
      %v1090 = vmax.f32 %v1026, 0.0
      %1091 = vst [vmem:[#allocation3] sm:$0xff] %v1027
      %1092 = vst [vmem:[#allocation3 + $0x8] sm:$0xff] %v1028
      %1093 = vst [vmem:[#allocation3 + $0x10] sm:$0xff] %v1029
      %1094 = vst [vmem:[#allocation3 + $0x18] sm:$0xff] %v1030
      %1095 = vst [vmem:[#allocation3 + $0x20] sm:$0xff] %v1031
      %1096 = vst [vmem:[#allocation3 + $0x28] sm:$0xff] %v1032
      %1097 = vst [vmem:[#allocation3 + $0x30] sm:$0xff] %v1033
      %1098 = vst [vmem:[#allocation3 + $0x38] sm:$0xff] %v1034
      %1099 = vst [vmem:[#allocation3 + $0x40] sm:$0xff] %v1035
      %1100 = vst [vmem:[#allocation3 + $0x48] sm:$0xff] %v1036
      %1101 = vst [vmem:[#allocation3 + $0x50] sm:$0xff] %v1037
      %1102 = vst [vmem:[#allocation3 + $0x58] sm:$0xff] %v1038
      %1103 = vst [vmem:[#allocation3 + $0x60] sm:$0xff] %v1039
      %1104 = vst [vmem:[#allocation3 + $0x68] sm:$0xff] %v1040
      %1105 = vst [vmem:[#allocation3 + $0x70] sm:$0xff] %v1041
      %1106 = vst [vmem:[#allocation3 + $0x78] sm:$0xff] %v1042
      %1107 = vst [vmem:[#allocation3 + $0x80] sm:$0xff] %v1043
      %1108 = vst [vmem:[#allocation3 + $0x88] sm:$0xff] %v1044
      %1109 = vst [vmem:[#allocation3 + $0x90] sm:$0xff] %v1045
      %1110 = vst [vmem:[#allocation3 + $0x98] sm:$0xff] %v1046
      %1111 = vst [vmem:[#allocation3 + $0xa0] sm:$0xff] %v1047
      %1112 = vst [vmem:[#allocation3 + $0xa8] sm:$0xff] %v1048
      %1113 = vst [vmem:[#allocation3 + $0xb0] sm:$0xff] %v1049
      %1114 = vst [vmem:[#allocation3 + $0xb8] sm:$0xff] %v1050
      %1115 = vst [vmem:[#allocation3 + $0xc0] sm:$0xff] %v1051
      %1116 = vst [vmem:[#allocation3 + $0xc8] sm:$0xff] %v1052
      %1117 = vst [vmem:[#allocation3 + $0xd0] sm:$0xff] %v1053
      %1118 = vst [vmem:[#allocation3 + $0xd8] sm:$0xff] %v1054
      %1119 = vst [vmem:[#allocation3 + $0xe0] sm:$0xff] %v1055
      %1120 = vst [vmem:[#allocation3 + $0xe8] sm:$0xff] %v1056
      %1121 = vst [vmem:[#allocation3 + $0xf0] sm:$0xff] %v1057
      %1122 = vst [vmem:[#allocation3 + $0xf8] sm:$0xff] %v1058
      %1123 = vst [vmem:[#allocation3 + $0x100] sm:$0xff] %v1059
      %1124 = vst [vmem:[#allocation3 + $0x108] sm:$0xff] %v1060
      %1125 = vst [vmem:[#allocation3 + $0x110] sm:$0xff] %v1061
      %1126 = vst [vmem:[#allocation3 + $0x118] sm:$0xff] %v1062
      %1127 = vst [vmem:[#allocation3 + $0x120] sm:$0xff] %v1063
      %1128 = vst [vmem:[#allocation3 + $0x128] sm:$0xff] %v1064
      %1129 = vst [vmem:[#allocation3 + $0x130] sm:$0xff] %v1065
      %1130 = vst [vmem:[#allocation3 + $0x138] sm:$0xff] %v1066
      %1131 = vst [vmem:[#allocation3 + $0x140] sm:$0xff] %v1067
      %1132 = vst [vmem:[#allocation3 + $0x148] sm:$0xff] %v1068
      %1133 = vst [vmem:[#allocation3 + $0x150] sm:$0xff] %v1069
      %1134 = vst [vmem:[#allocation3 + $0x158] sm:$0xff] %v1070
      %1135 = vst [vmem:[#allocation3 + $0x160] sm:$0xff] %v1071
      %1136 = vst [vmem:[#allocation3 + $0x168] sm:$0xff] %v1072
      %1137 = vst [vmem:[#allocation3 + $0x170] sm:$0xff] %v1073
      %1138 = vst [vmem:[#allocation3 + $0x178] sm:$0xff] %v1074
      %1139 = vst [vmem:[#allocation3 + $0x180] sm:$0xff] %v1075
      %1140 = vst [vmem:[#allocation3 + $0x188] sm:$0xff] %v1076
      %1141 = vst [vmem:[#allocation3 + $0x190] sm:$0xff] %v1077
      %1142 = vst [vmem:[#allocation3 + $0x198] sm:$0xff] %v1078
      %1143 = vst [vmem:[#allocation3 + $0x1a0] sm:$0xff] %v1079
      %1144 = vst [vmem:[#allocation3 + $0x1a8] sm:$0xff] %v1080
      %1145 = vst [vmem:[#allocation3 + $0x1b0] sm:$0xff] %v1081
      %1146 = vst [vmem:[#allocation3 + $0x1b8] sm:$0xff] %v1082
      %1147 = vst [vmem:[#allocation3 + $0x1c0] sm:$0xff] %v1083
      %1148 = vst [vmem:[#allocation3 + $0x1c8] sm:$0xff] %v1084
      %1149 = vst [vmem:[#allocation3 + $0x1d0] sm:$0xff] %v1085
      %1150 = vst [vmem:[#allocation3 + $0x1d8] sm:$0xff] %v1086
      %1151 = vst [vmem:[#allocation3 + $0x1e0] sm:$0xff] %v1087
      %1152 = vst [vmem:[#allocation3 + $0x1e8] sm:$0xff] %v1088
      %1153 = vst [vmem:[#allocation3 + $0x1f0] sm:$0xff] %v1089
      %1154 = vst [vmem:[#allocation3 + $0x1f8] sm:$0xff] %v1090
    $region25: #{ppm_forward.1} parent=1 // pred_fallthru
      _
    // Predicated region
    $region26: #{ppm_forward.1} parent=1 // pred_check
      _
    $region27: #{ppm_forward.1} parent=1 // pred_check_branch
      %1156 = sbr.rel (0) target = $region29
    $region28: #{ppm_forward.1} parent=1 // pred_region
      %s1158 = ssub.s32 8192, 8192
      %1159 = vsyncadd [#allocation4], %s1158
      %s1160 = sshll.u32 [#allocation3], 4
      %s1161 = int_to_ptr.vmem [resolvable:$true] %s1160
      %1166 = dma.vmem_to_hbm [thread:$0]  %s1161, 8192, %s3, [#allocation4], 128, 128, 8
    $region29: #{ppm_forward.1} parent=1 // pred_fallthru
      _
    // Predicated region
    $region30: #{ppm_forward.1} parent=1 // pred_check
      _
    $region31: #{ppm_forward.1} parent=1 // pred_check_branch
      %1168 = sbr.rel (0) target = $region33
    $region32: #{ppm_forward.1} parent=1 // pred_region
      %1169 = dma.done [#allocation4], 8192
    $region33: #{ppm_forward.1} parent=1 // pred_fallthru
      _
    %1170 = vsyncpa [#allocation4], 1

</llo_original>
